<compile_context>
chip_gen: v6e
topology: v6e:2x2x1
jax: 0.10.0
libtpu: 0.0.40
codegen_flags: <defaults>
</compile_context>

<pallas_src>
import jax
import jax.numpy as jnp
from jax.experimental import pallas as pl
from jax.experimental.pallas import tpu as pltpu


_LANE = 128
_TARGET_TILE_BYTES = 4 * 1024 * 1024  # ~4 MiB per tile


def _copy_kernel(x_ref, o_ref):
    # Pure identity: whole-tile VMEM load + store.
    o_ref[...] = x_ref[...]


def _sublane_multiple(itemsize: int) -> int:
    # Min second-to-last tile multiple per dtype packing: f32->8, bf16->16, int8->32.
    return {4: 8, 2: 16, 1: 32}.get(itemsize, 8)


def _pick_layout(total: int, itemsize: int):
    """Pick (rows, cols, tile_rows) for a lane-dense 2-D copy layout."""
    # Prefer the largest multiple of 128 that divides the flattened size exactly
    # (no padding); otherwise pad the tail to a 512-lane row.
    cols = None
    for c in (4096, 2048, 1024, 512, 256, _LANE):
        if total % c == 0:
            cols = c
            break
    if cols is None:
        cols = 512 if total >= 512 else _LANE

    rows = pl.cdiv(total, cols)
    sub = _sublane_multiple(itemsize)
    row_bytes = cols * itemsize

    # Biggest tile whose double-buffered in+out footprint (~4x tile) stays well
    # under the 32 MiB default scoped VMEM on every generation (incl. v7x's
    # 64 MiB physical VMEM).
    tr = max(sub, (_TARGET_TILE_BYTES // row_bytes) // sub * sub)
    if tr >= rows:
        if rows >= 2 * sub and rows * row_bytes >= (4 << 20):
            # Large single-tile input: split into >=2 grid steps so v7x's two
            # TensorCores can both contribute HBM bandwidth.
            tr = pl.cdiv(pl.cdiv(rows, 2), sub) * sub
        else:
            tr = rows  # small input: one whole-array tile
    return rows, cols, tr


def gpt2_forward(x):
    """GPT2.forward equivalent (identity)."""
    if x.size == 0:
        return x

    orig_shape = x.shape
    total = x.size
    flat = x.reshape(-1)

    rows, cols, tr = _pick_layout(total, flat.dtype.itemsize)
    grid_rows = pl.cdiv(rows, tr)
    rows_padded = grid_rows * tr
    padded_total = rows_padded * cols
    if padded_total != total:
        flat = jnp.pad(flat, (0, padded_total - total))
    x2 = flat.reshape(rows_padded, cols)

    out2 = pl.pallas_call(
        _copy_kernel,
        out_shape=jax.ShapeDtypeStruct((rows_padded, cols), x2.dtype),
        grid_spec=pltpu.PrefetchScalarGridSpec(
            num_scalar_prefetch=0,
            grid=(grid_rows,),
            in_specs=[pl.BlockSpec((tr, cols), lambda i: (i, 0))],
            out_specs=pl.BlockSpec((tr, cols), lambda i: (i, 0)),
        ),
        compiler_params=pltpu.CompilerParams(
            dimension_semantics=("parallel",),
        ),
        # Alias the (temporary, already flattened/padded) input buffer to the
        # output so no separate HBM output allocation is materialized.
        input_output_aliases={0: 0},
    )(x2)

    out_flat = out2.reshape(-1)
    if padded_total != total:
        out_flat = out_flat[:total]
    return out_flat.reshape(orig_shape)


if __name__ == "__main__":
    key = jax.random.PRNGKey(0)
    # Small sequence-model style input: (batch, seq, hidden)
    x = jax.random.normal(key, (2, 8, 32), dtype=jnp.float32)

    y = gpt2_forward(x)
    jax.block_until_ready(y)

    assert y.shape == x.shape and y.dtype == x.dtype
    assert bool(jnp.array_equal(y, x))
    print("KERNEL_OK")
</pallas_src>

<mosaic_0001>
module attributes {stable_mosaic.version = 11 : i64} {
  func.func @_copy_kernel(%arg0: i32, %arg1: memref<1x512xf32, #tpu.memory_space<vmem>>, %arg2: memref<1x512xf32, #tpu.memory_space<vmem>>) attributes {dimension_semantics = [#tpu.dimension_semantics<parallel>], iteration_bounds = array<i64: 1>, scalar_prefetch = 0 : i64, scratch_operands = 0 : i64, tpu.core_type = #tpu.core_type<tc>, window_params = [{transform_indices = @transform_0, window_bounds = array<i64: 1, 512>}, {transform_indices = @transform_1, window_bounds = array<i64: 1, 512>}]} {
    %c0 = arith.constant 0 : index
    %c0_0 = arith.constant 0 : index
    %0 = vector.load %arg1[%c0, %c0_0] : memref<1x512xf32, #tpu.memory_space<vmem>>, vector<1x512xf32>
    %c0_1 = arith.constant 0 : index
    %c0_2 = arith.constant 0 : index
    %1 = vector.load %arg2[%c0_1, %c0_2] : memref<1x512xf32, #tpu.memory_space<vmem>>, vector<1x512xf32>
    tpu.vector_store %arg2[%c0_1, %c0_2], %0 {strides = array<i32>} : memref<1x512xf32, #tpu.memory_space<vmem>>, vector<1x512xf32>,
    return
  }
  func.func @transform_0(%arg0: i32) -> (i32, i32) {
    %c0_i32 = arith.constant 0 : i32
    %c0_i32_0 = arith.constant 0 : i32
    return %arg0, %c0_i32 : i32, i32
  }
  func.func @transform_1(%arg0: i32) -> (i32, i32) {
    %c0_i32 = arith.constant 0 : i32
    %c0_i32_0 = arith.constant 0 : i32
    return %arg0, %c0_i32 : i32, i32
  }
}

</mosaic_0001>

<llo_original>
// kernel: tpu_custom_call.1
$region0: #{tpu_custom_call.1}
  #allocation0 [shape = 'u32[]', space=smem, size = 0x4, offset = 0x4, fixed_abs, tag = 'smem constant byte address 0x4 - core index']
  #allocation1 [shape = 'u32[144,128]{1,0:T(1,128)}', space=vmem, size = 0x12000, scoped, tag = 'internal scratch']
  %s0 = inlined_call_operand.hbm [shape: f32[1,512], index: 0, kind: input, shape index: {}, may-alias: {0,1}]
  %s1 = inlined_call_operand.hbm [shape: f32[1,512], index: 1, kind: output, shape index: {}, may-alias: {0,1}]
  %s2 = sld [smem:[#allocation0]]
  $region18: #{tpu_custom_call.1} parent=0
    _
  %s4 = ssub.s32 1, %s2
  %s5 = scalar_select 0, %s4, %s2
  $region1: #{tpu_custom_call.1} parent=0
    #allocation2 [shape = 'u8[2048]{0}', space=vmem, size = 0x800, scoped, tag = 'input window, operand 0, single buffered']
    #allocation3 [shape = 's32[1]{0}', space=sflag, size = 0x4, scoped, tag = 'scoped memory for tpu_custom_call.1']
    #allocation4 [shape = 's32[1]{0}', space=sflag, size = 0x4, scoped, tag = 'scoped memory for tpu_custom_call.1']
    #allocation5 [shape = 'u8[2048]{0}', space=vmem, size = 0x800, scoped, tag = 'output window, operand 0, single buffered']
    %6 = vsyncpa [#allocation3], 0
    %7 = vsyncpa [#allocation4], 0
    // Predicated region
    $region2: #{tpu_custom_call.1} parent=1 // pred_check
      _
    $region3: #{tpu_custom_call.1} parent=1 // pred_check_branch
      %9 = sbr.rel (0) target = $region5
    $region4: #{tpu_custom_call.1} parent=1 // pred_region
      %s11 = ssub.s32 64, 64
      %12 = vsyncadd [#allocation3], %s11
      %s14 = sshll.u32 [#allocation2], 4
      %s15 = int_to_ptr.vmem [resolvable:$true] %s14
      %17 = dma.hbm_to_vmem [thread:$0]  %s0, 64, %s15, [#allocation3]
    $region5: #{tpu_custom_call.1} parent=1 // pred_fallthru
      _
    // Predicated region
    $region6: #{tpu_custom_call.1} parent=1 // pred_check
      _
    $region7: #{tpu_custom_call.1} parent=1 // pred_check_branch
      %19 = sbr.rel (0) target = $region9
    $region8: #{tpu_custom_call.1} parent=1 // pred_region
      %20 = dma.done [#allocation3], 64
    $region9: #{tpu_custom_call.1} parent=1 // pred_fallthru
      _
    %v21 = vld [vmem:[#allocation2] sm:$0xf]
    %v22 = vlaneseq
    %vm23 = vcmp.ge.s32.totalorder %v22, 0
    %vm24 = vcmp.lt.s32.totalorder %v22, 512
    %vm25 = vmand %vm23, %vm24
    %26 = vst.msk [vmem:[#allocation5] sm:$0xf] %vm25, %v21
    // Predicated region
    $region10: #{tpu_custom_call.1} parent=1 // pred_check
      _
    $region11: #{tpu_custom_call.1} parent=1 // pred_check_branch
      %28 = sbr.rel (0) target = $region13
    $region12: #{tpu_custom_call.1} parent=1 // pred_region
      %s30 = ssub.s32 64, 64
      %31 = vsyncadd [#allocation4], %s30
      %s33 = sshll.u32 [#allocation5], 4
      %s34 = int_to_ptr.vmem [resolvable:$true] %s33
      %36 = dma.vmem_to_hbm [thread:$0]  %s34, 64, %s1, [#allocation4]
    $region13: #{tpu_custom_call.1} parent=1 // pred_fallthru
      _
    // Predicated region
    $region14: #{tpu_custom_call.1} parent=1 // pred_check
      _
    $region15: #{tpu_custom_call.1} parent=1 // pred_check_branch
      %38 = sbr.rel (0) target = $region17
    $region16: #{tpu_custom_call.1} parent=1 // pred_region
      %39 = dma.done [#allocation4], 64
    $region17: #{tpu_custom_call.1} parent=1 // pred_fallthru
      _
    %40 = vsyncpa [#allocation3], 1
    %41 = vsyncpa [#allocation4], 1

</llo_original>
